<compile_context>
chip_gen: v7x
topology: tpu7x:2x2x1
jax: 0.10.0
libtpu: 0.0.40
codegen_flags: <defaults>
</compile_context>

<pallas_src>
import jax
import jax.numpy as jnp
from jax.experimental import pallas as pl
from jax.experimental.pallas import tpu as pltpu


def _param_kernel(mean_ref, x_ref, o_ref):
    # mean_ref: (1, 1) f32 scalar in SMEM (weight mean, precomputed in wrapper)
    # x_ref / o_ref: (block_rows, lane) tile in VMEM
    o_ref[...] = (mean_ref[0, 0] * x_ref[...]).astype(o_ref.dtype)


def _default_block_rows() -> int:
    """~4 MiB f32 tiles on newer chips, ~2 MiB on v5e/unknown."""
    try:
        kind = jax.devices()[0].device_kind.lower()
    except Exception:
        kind = ""
    if any(tag in kind for tag in ("v6", "v7", "7x")):
        return 2048   # 4 MiB @ lane=512 f32; resident 16 MiB < 32 MiB scoped
    return 1024       # 2 MiB; resident 8 MiB < v5e's 16 MiB scoped default


def _sublane_align(dtype) -> int:
    return {4: 8, 2: 16, 1: 32}.get(jnp.dtype(dtype).itemsize, 8)


def _scale_2d(mean_w: jax.Array, x2d: jax.Array, out_dtype) -> jax.Array:
    """Runs the Pallas elementwise-scale over a (rows, lane) slab."""
    rows, lane = x2d.shape
    sub = _sublane_align(x2d.dtype)

    block_rows = _default_block_rows()
    # Ensure >= 2 grid steps on medium inputs so both v7x TensorCores work,
    # but never drop below the native sublane packing for this dtype.
    while block_rows > sub and pl.cdiv(rows, block_rows) < 2:
        block_rows //= 2
    if rows <= block_rows:
        # Tiny input: one full-extent block (allowed regardless of (8,128)).
        block_rows = rows

    grid = (pl.cdiv(rows, block_rows),)

    return pl.pallas_call(
        _param_kernel,
        out_shape=jax.ShapeDtypeStruct((rows, lane), out_dtype),
        grid=grid,
        in_specs=[
            pl.BlockSpec((1, 1), lambda i: (0, 0),
                         memory_space=pltpu.MemorySpace.SMEM),
            pl.BlockSpec((block_rows, lane), lambda i: (i, 0)),
        ],
        out_specs=pl.BlockSpec((block_rows, lane), lambda i: (i, 0)),
        compiler_params=pltpu.CompilerParams(
            dimension_semantics=("parallel",)),
    )(mean_w, x2d)


def param_forward(weight: jax.Array, inp: jax.Array) -> jax.Array:
    """Computes weight.mean() * inp with the elementwise hot path in Pallas."""
    orig_shape = inp.shape
    total = inp.size
    out_dtype = jnp.result_type(weight.dtype, inp.dtype)

    # Hoisted scalar: f32 mean of the weight vector.
    # TODO(synk): torch reduces in weight.dtype (e.g. bf16); f32 is more
    # accurate but not bit-identical for low-precision weights.
    mean_w = jnp.mean(weight.astype(jnp.float32)).reshape(1, 1)

    # Pick a lane width (multiple of 128) dividing the flat length so the
    # whole input is processed copy-free (no pad, no output slice).
    lane = None
    for cand in (512, 256, 128):
        if total % cand == 0:
            lane = cand
            break

    flat = inp.reshape(-1)

    if lane is not None:
        rows = total // lane
        out2d = _scale_2d(mean_w, flat.reshape(rows, lane), out_dtype)
        return out2d.reshape(orig_shape)

    # Irregular size: Pallas on the lane-aligned bulk, tiny jnp tail (<512).
    lane = 512
    bulk = (total // lane) * lane
    if bulk == 0:
        return (mean_w[0, 0] * flat).astype(out_dtype).reshape(orig_shape)
    out_bulk = _scale_2d(mean_w, flat[:bulk].reshape(bulk // lane, lane),
                         out_dtype)
    out_tail = (mean_w[0, 0] * flat[bulk:]).astype(out_dtype)
    return jnp.concatenate([out_bulk.reshape(-1), out_tail]).reshape(orig_shape)


if __name__ == "__main__":
    key = jax.random.PRNGKey(0)
    kw, kx, ky = jax.random.split(key, 3)

    # Param(size=32): weight is a length-32 parameter vector.
    size = 32
    weight = jax.random.normal(kw, (size,), dtype=jnp.float32)

    # Small NCHW input consistent with an elementwise forward pass.
    x = jax.random.normal(kx, (2, 4, 16, 16), dtype=jnp.float32)

    out = param_forward(weight, x)
    jax.block_until_ready(out)

    ref = jnp.mean(weight) * x
    assert out.shape == x.shape and out.dtype == ref.dtype
    assert jnp.allclose(out, ref, atol=1e-5, rtol=1e-5)

    # Exercise the irregular-size fallback (not a multiple of 128).
    y = jax.random.normal(ky, (3, 5, 7, 11), dtype=jnp.float32)
    out_y = param_forward(weight, y)
    jax.block_until_ready(out_y)
    ref_y = jnp.mean(weight) * y
    assert out_y.shape == y.shape
    assert jnp.allclose(out_y, ref_y, atol=1e-5, rtol=1e-5)

    print("KERNEL_OK")
</pallas_src>

<mosaic_0001>
module attributes {stable_mosaic.version = 11 : i64} {
  func.func @_param_kernel(%arg0: i32, %arg1: memref<1x1xf32, #tpu.memory_space<smem>>, %arg2: memref<4x512xf32, #tpu.memory_space<vmem>>, %arg3: memref<4x512xf32, #tpu.memory_space<vmem>>) attributes {dimension_semantics = [#tpu.dimension_semantics<parallel>], iteration_bounds = array<i64: 1>, scalar_prefetch = 0 : i64, scratch_operands = 0 : i64, tpu.core_type = #tpu.core_type<tc>, window_params = [{transform_indices = @transform_0, window_bounds = array<i64: 1, 1>}, {transform_indices = @transform_1, window_bounds = array<i64: 4, 512>}, {transform_indices = @transform_2, window_bounds = array<i64: 4, 512>}]} {
    %c0 = arith.constant 0 : index
    %c0_0 = arith.constant 0 : index
    %0 = memref.load %arg1[%c0, %c0_0] : memref<1x1xf32, #tpu.memory_space<smem>>
    %c0_1 = arith.constant 0 : index
    %c0_2 = arith.constant 0 : index
    %1 = vector.load %arg2[%c0_1, %c0_2] : memref<4x512xf32, #tpu.memory_space<vmem>>, vector<4x512xf32>
    %2 = vector.broadcast %0 : f32 to vector<4x512xf32>
    %3 = arith.mulf %2, %1 : vector<4x512xf32>
    %c0_3 = arith.constant 0 : index
    %c0_4 = arith.constant 0 : index
    %4 = vector.load %arg3[%c0_3, %c0_4] : memref<4x512xf32, #tpu.memory_space<vmem>>, vector<4x512xf32>
    tpu.vector_store %arg3[%c0_3, %c0_4], %3 {strides = array<i32>} : memref<4x512xf32, #tpu.memory_space<vmem>>, vector<4x512xf32>,
    return
  }
  func.func @transform_0(%arg0: i32) -> (i32, i32) {
    %c0_i32 = arith.constant 0 : i32
    %c0_i32_0 = arith.constant 0 : i32
    %c0_i32_1 = arith.constant 0 : i32
    return %c0_i32, %c0_i32_0 : i32, i32
  }
  func.func @transform_1(%arg0: i32) -> (i32, i32) {
    %c0_i32 = arith.constant 0 : i32
    %c0_i32_0 = arith.constant 0 : i32
    return %arg0, %c0_i32 : i32, i32
  }
  func.func @transform_2(%arg0: i32) -> (i32, i32) {
    %c0_i32 = arith.constant 0 : i32
    %c0_i32_0 = arith.constant 0 : i32
    return %arg0, %c0_i32 : i32, i32
  }
}

</mosaic_0001>

<llo_original>
// kernel: tpu_custom_call.1
$region0: #{tpu_custom_call.1}
  #allocation0 [shape = 'u32[]', space=smem, size = 0x4, offset = 0x4, fixed_abs, tag = 'smem constant byte address 0x4 - core index']
  #allocation1 [shape = 'u32[144,128]{1,0:T(1,128)}', space=vmem, size = 0x12000, scoped, tag = 'internal scratch']
  #allocation2 [shape = 'f32[1,1]{1,0:T(1,128)S(6)}', space=smem, size = 0x200, scoped, tag = 'scoped memory for tpu_custom_call.1']
  %s0 = inlined_call_operand.<no memory space> [shape: f32[1,1], index: 0, kind: input, shape index: {}]
  %s1 = inlined_call_operand.hbm [shape: f32[4,512], index: 1, kind: input, shape index: {}]
  %s2 = inlined_call_operand.hbm [shape: f32[4,512], index: 2, kind: output, shape index: {}]
  %s3 = sld [smem:[#allocation0]]
  $region22: #{tpu_custom_call.1} parent=0
    _
  %s5 = ssub.s32 1, %s3
  %s6 = scalar_select 0, %s5, %s3
  %7 = sst [smem:[#allocation2]] %s0
  $region1: #{tpu_custom_call.1} parent=0
    #allocation3 [shape = 'u8[8192]{0}', space=vmem, size = 0x2000, scoped, tag = 'input window, operand 1, single buffered']
    #allocation4 [shape = 's32[1]{0}', space=sflag, size = 0x4, scoped, tag = 'scoped memory for tpu_custom_call.1']
    #allocation5 [shape = 's32[1]{0}', space=sflag, size = 0x4, scoped, tag = 'scoped memory for tpu_custom_call.1']
    #allocation6 [shape = 'u8[8192]{0}', space=vmem, size = 0x2000, scoped, tag = 'output window, operand 0, single buffered']
    %8 = vsyncpa [#allocation4], 0
    %9 = vsyncpa [#allocation5], 0
    // Predicated region
    $region2: #{tpu_custom_call.1} parent=1 // pred_check
      _
    $region3: #{tpu_custom_call.1} parent=1 // pred_check_branch
      %11 = sbr.rel (0) target = $region5
    $region4: #{tpu_custom_call.1} parent=1 // pred_region
      _
    $region5: #{tpu_custom_call.1} parent=1 // pred_fallthru
      _
    // Predicated region
    $region6: #{tpu_custom_call.1} parent=1 // pred_check
      _
    $region7: #{tpu_custom_call.1} parent=1 // pred_check_branch
      %13 = sbr.rel (0) target = $region9
    $region8: #{tpu_custom_call.1} parent=1 // pred_region
      %s15 = ssub.s32 256, 256
      %16 = vsyncadd [#allocation4], %s15
      %s18 = sshll.u32 [#allocation3], 4
      %s19 = int_to_ptr.vmem [resolvable:$true] %s18
      %21 = dma.hbm_to_vmem [thread:$0]  %s1, 256, %s19, [#allocation4]
    $region9: #{tpu_custom_call.1} parent=1 // pred_fallthru
      _
    // Predicated region
    $region10: #{tpu_custom_call.1} parent=1 // pred_check
      _
    $region11: #{tpu_custom_call.1} parent=1 // pred_check_branch
      %23 = sbr.rel (0) target = $region13
    $region12: #{tpu_custom_call.1} parent=1 // pred_region
      %24 = dma.done [#allocation4], 256
    $region13: #{tpu_custom_call.1} parent=1 // pred_fallthru
      _
    %s25 = sld [smem:[#allocation2]]
    %v26 = vld [vmem:[#allocation3] sm:$0xff]
    %v27 = vld [vmem:[#allocation3 + $0x8] sm:$0xff]
    %v28 = vstv %s25
    %v29 = vmul.f32 %v28, %v26
    %v30 = vmul.f32 %v28, %v27
    %31 = vst [vmem:[#allocation6] sm:$0xff] %v29
    %32 = vst [vmem:[#allocation6 + $0x8] sm:$0xff] %v30
    // Predicated region
    $region14: #{tpu_custom_call.1} parent=1 // pred_check
      _
    $region15: #{tpu_custom_call.1} parent=1 // pred_check_branch
      %34 = sbr.rel (0) target = $region17
    $region16: #{tpu_custom_call.1} parent=1 // pred_region
      %s36 = ssub.s32 256, 256
      %37 = vsyncadd [#allocation5], %s36
      %s39 = sshll.u32 [#allocation6], 4
      %s40 = int_to_ptr.vmem [resolvable:$true] %s39
      %42 = dma.vmem_to_hbm [thread:$0]  %s40, 256, %s2, [#allocation5]
    $region17: #{tpu_custom_call.1} parent=1 // pred_fallthru
      _
    // Predicated region
    $region18: #{tpu_custom_call.1} parent=1 // pred_check
      _
    $region19: #{tpu_custom_call.1} parent=1 // pred_check_branch
      %44 = sbr.rel (0) target = $region21
    $region20: #{tpu_custom_call.1} parent=1 // pred_region
      %45 = dma.done [#allocation5], 256
    $region21: #{tpu_custom_call.1} parent=1 // pred_fallthru
      _
    %46 = vsyncpa [#allocation4], 1
    %47 = vsyncpa [#allocation5], 1

</llo_original>
